<compile_context>
chip_gen: v7x
topology: tpu7x:2x2x1
jax: 0.10.0
libtpu: 0.0.40
codegen_flags: <defaults>
</compile_context>

<pallas_src>
import jax
import jax.numpy as jnp
from jax import lax
from jax.experimental import pallas as pl
from jax.experimental.pallas import tpu as pltpu


# ----------------------------------------------------------------------------
# Fused kernel: L stacked RNN layers (tanh, wavefront) + Linear + (ELU + 1).
# Inputs (whole-array, VMEM):
#   x_flat     (S*B, F)     time-major rows (row = t*B + b)
#   w0_pad     (F,   L*H)   layer-0 W_ih^T padded with zeros to all-layer width
#   rhs        (L*H, L*H)   block matrix: diag W_l_hh^T, super-diag W_l_ih^T
#   bias_full  (1,   L*H)   [b_0 | b_1 | ...]   (b = b_ih + b_hh per layer)
#   linw_pad   (L*H, O)     head W^T, zeros except last layer's rows
#   lin_b      (1,   O)
# Outputs:
#   out_flat   (S*B, O)     time-major rows
#   h_flat     (L*B, H)     final hidden state per layer (flattened)
# ----------------------------------------------------------------------------
def make_fused_kernel(num_layers, seq, batch, hidden, out_dim):
    L, S, B, H = num_layers, seq, batch, hidden
    LH = L * H
    n_steps = S + L - 1          # wavefront length

    def kernel(x_ref, w0_ref, rhs_ref, bias_ref, linw_ref, linb_ref,
               out_ref, hout_ref):
        # Hoisted layer-0 input projection (+ all biases), off the serial path.
        xp = (jnp.dot(x_ref[...], w0_ref[...],
                      preferred_element_type=jnp.float32)
              + bias_ref[...])                           # (S*B, L*H)
        bias_full = bias_ref[...]                        # (1, L*H)
        rhs = rhs_ref[...]                               # stays in vregs

        col = lax.broadcasted_iota(jnp.int32, (B, LH), 1)

        state = jnp.zeros((B, LH), jnp.float32)          # [h_0 | h_1 | ...]
        collected = []                                   # last-layer outputs
        finals = [None] * L                              # final hidden / layer

        for w in range(n_steps):                         # static, fully unrolled
            # Layer 0 gets its x-projection (+b0); layers >=1 get their bias;
            # past w >= S layer 0 is inactive and its columns are discarded.
            add_t = xp[w * B:(w + 1) * B, :] if w < S else bias_full
            z = jnp.dot(state, rhs,
                        preferred_element_type=jnp.float32) + add_t
            state = jnp.tanh(z)                          # one EUP pass, all layers

            if w < L - 1:
                # Ramp-up: layers l > w haven't started yet -> keep them at 0.
                state = jnp.where(col < (w + 1) * H, state, 0.0)

            if w >= L - 1:
                # Full state snapshot; non-last-layer columns are zeroed out
                # by the padded head weight below.
                collected.append(state)

            for l in range(L):
                if w == S - 1 + l:                       # layer l's last step
                    finals[l] = state[:, l * H:(l + 1) * H]

        # Fused head over all S*B rows at once: Linear -> ELU -> +1.
        acts = jnp.concatenate(collected, axis=0)        # (S*B, L*H), vregs
        zh = (jnp.dot(acts, linw_ref[...],
                      preferred_element_type=jnp.float32)
              + linb_ref[...])
        out_ref[...] = jnp.where(
            zh > 0, zh + 1.0, jnp.exp(jnp.minimum(zh, 0.0))
        ).astype(out_ref.dtype)

        # Final hiddens written once, as a single contiguous slab.
        hout_ref[...] = jnp.concatenate(finals, axis=0).astype(hout_ref.dtype)

    return kernel


# ----------------------------------------------------------------------------
# Wrapper-side plumbing: build the block operands (tiny, off the kernel path).
# rnn_params[l] = (W_ih^T (in,H), W_hh^T (H,H), bias (1,H) = b_ih + b_hh)
# ----------------------------------------------------------------------------
def _build_fused_operands(rnn_params, lin_w_t, features):
    L = len(rnn_params)
    H = rnn_params[0][1].shape[0]
    LH = L * H
    O = lin_w_t.shape[1]

    w0_pad = jnp.zeros((features, LH), jnp.float32).at[:, :H].set(
        rnn_params[0][0])

    rhs = jnp.zeros((LH, LH), jnp.float32)
    for l, (wih_t, whh_t, _) in enumerate(rnn_params):
        rhs = rhs.at[l * H:(l + 1) * H, l * H:(l + 1) * H].set(whh_t)
        if l >= 1:
            rhs = rhs.at[(l - 1) * H:l * H, l * H:(l + 1) * H].set(wih_t)

    bias_full = jnp.concatenate([b for (_, _, b) in rnn_params], axis=1)

    linw_pad = jnp.zeros((LH, O), jnp.float32).at[(L - 1) * H:, :].set(lin_w_t)
    return w0_pad, rhs, bias_full, linw_pad


# ----------------------------------------------------------------------------
# Forward pass wrapper: single fused pallas_call (no grid: whole problem fits
# in a few vregs; a grid step would cost more than the kernel itself).
# ----------------------------------------------------------------------------
@jax.jit
def ivs_rnn_forward(x, rnn_params, lin_w_t, lin_b):
    """x: (B, S, F) batch_first. Returns (out (B,S,O), h_out (L,B,H))."""
    B, S, F = x.shape
    L = len(rnn_params)
    H = rnn_params[0][1].shape[0]
    O = lin_w_t.shape[1]

    # Layout plumbing on ~256 B input / ~2 KB output: time-major flatten.
    x_flat = jnp.transpose(x, (1, 0, 2)).reshape(S * B, F)
    w0_pad, rhs, bias_full, linw_pad = _build_fused_operands(
        rnn_params, lin_w_t, F)

    def vmem_spec():
        return pl.BlockSpec(memory_space=pltpu.MemorySpace.VMEM)

    out_flat, h_flat = pl.pallas_call(
        make_fused_kernel(L, S, B, H, O),
        out_shape=(jax.ShapeDtypeStruct((S * B, O), jnp.float32),
                   jax.ShapeDtypeStruct((L * B, H), jnp.float32)),
        in_specs=[vmem_spec() for _ in range(6)],
        out_specs=(vmem_spec(), vmem_spec()),
    )(x_flat, w0_pad, rhs, bias_full, linw_pad, lin_b)

    out = out_flat.reshape(S, B, O).transpose(1, 0, 2)   # -> (B, S, O)
    h_out = h_flat.reshape(L, B, H)
    return out, h_out


# ----------------------------------------------------------------------------
# Pure-JAX reference (mirrors torch.nn.RNN / Linear / ELU semantics)
# ----------------------------------------------------------------------------
def ivs_rnn_reference(x, rnn_params, lin_w_t, lin_b):
    B, S, _ = x.shape
    layer_in = x
    h_finals = []
    for wih_t, whh_t, b in rnn_params:
        H = wih_t.shape[1]
        h = jnp.zeros((B, H), jnp.float32)
        ys = []
        for t in range(S):
            h = jnp.tanh(layer_in[:, t, :] @ wih_t + h @ whh_t + b)
            ys.append(h)
        layer_in = jnp.stack(ys, axis=1)
        h_finals.append(h)
    z = layer_in @ lin_w_t + lin_b
    out = jnp.where(z > 0, z, jnp.exp(z) - 1.0) + 1.0
    return out, jnp.stack(h_finals, axis=0)


# ----------------------------------------------------------------------------
# Deterministic parameter init (PyTorch-style uniform(-1/sqrt(H), 1/sqrt(H)))
# ----------------------------------------------------------------------------
def init_params(key, features, hidden, num_layers, out_dim):
    k = 1.0 / jnp.sqrt(hidden)
    rnn_params = []
    for layer in range(num_layers):
        in_size = features if layer == 0 else hidden
        key, k1, k2, k3, k4 = jax.random.split(key, 5)
        w_ih = jax.random.uniform(k1, (hidden, in_size), jnp.float32, -k, k)
        w_hh = jax.random.uniform(k2, (hidden, hidden), jnp.float32, -k, k)
        b_ih = jax.random.uniform(k3, (hidden,), jnp.float32, -k, k)
        b_hh = jax.random.uniform(k4, (hidden,), jnp.float32, -k, k)
        rnn_params.append((w_ih.T, w_hh.T, (b_ih + b_hh)[None, :]))
    key, k1, k2 = jax.random.split(key, 3)
    w_lin = jax.random.uniform(k1, (out_dim, hidden), jnp.float32, -k, k)
    b_lin = jax.random.uniform(k2, (out_dim,), jnp.float32, -k, k)
    return rnn_params, w_lin.T, b_lin[None, :]


if __name__ == "__main__":
    # Small shapes consistent with the module's forward.
    batch, seq = 2, 8
    features, hidden, num_layers = 4, 32, 2
    num_maturities, num_moneynesses = 3, 5
    out_dim = num_maturities * num_moneynesses * 2   # 30

    key = jax.random.PRNGKey(0)
    key, xk = jax.random.split(key)
    x = jax.random.normal(xk, (batch, seq, features), jnp.float32)

    rnn_params, lin_w_t, lin_b = init_params(
        key, features, hidden, num_layers, out_dim)

    out, h_out = ivs_rnn_forward(x, tuple(rnn_params), lin_w_t, lin_b)
    out = jax.block_until_ready(out)
    h_out = jax.block_until_ready(h_out)

    assert out.shape == (batch, seq, out_dim)
    assert h_out.shape == (num_layers, batch, hidden)

    ref_out, ref_h = ivs_rnn_reference(x, rnn_params, lin_w_t, lin_b)
    assert jnp.allclose(out, ref_out, rtol=1e-4, atol=1e-4)
    assert jnp.allclose(h_out, ref_h, rtol=1e-4, atol=1e-4)

    print("KERNEL_OK")
</pallas_src>

<mosaic_0001>
module attributes {stable_mosaic.version = 11 : i64} {
  func.func @kernel(%arg0: memref<16x4xf32, #tpu.memory_space<vmem>>, %arg1: memref<4x64xf32, #tpu.memory_space<vmem>>, %arg2: memref<64x64xf32, #tpu.memory_space<vmem>>, %arg3: memref<1x64xf32, #tpu.memory_space<vmem>>, %arg4: memref<64x30xf32, #tpu.memory_space<vmem>>, %arg5: memref<1x30xf32, #tpu.memory_space<vmem>>, %arg6: memref<16x30xf32, #tpu.memory_space<vmem>>, %arg7: memref<4x32xf32, #tpu.memory_space<vmem>>) attributes {dimension_semantics = [], scalar_prefetch = 0 : i64, scratch_operands = 0 : i64, tpu.core_type = #tpu.core_type<tc>} {
    %c0 = arith.constant 0 : index
    %c0_0 = arith.constant 0 : index
    %0 = vector.load %arg0[%c0, %c0_0] : memref<16x4xf32, #tpu.memory_space<vmem>>, vector<16x4xf32>
    %c0_1 = arith.constant 0 : index
    %c0_2 = arith.constant 0 : index
    %1 = vector.load %arg1[%c0_1, %c0_2] : memref<4x64xf32, #tpu.memory_space<vmem>>, vector<4x64xf32>
    %cst = arith.constant dense<0.000000e+00> : vector<16x64xf32>
    %2 = tpu.matmul %0, %1, %cst {dimension_numbers = #tpu.dot_dimension_numbers<[1], [0], [0], [1], [0, 0, 1, 1], [], []>} : vector<16x4xf32>, vector<4x64xf32>, vector<16x64xf32> -> vector<16x64xf32>
    %c0_3 = arith.constant 0 : index
    %c0_4 = arith.constant 0 : index
    %3 = vector.load %arg3[%c0_3, %c0_4] : memref<1x64xf32, #tpu.memory_space<vmem>>, vector<1x64xf32>
    %4 = vector.broadcast %3 : vector<1x64xf32> to vector<16x64xf32>
    %5 = arith.addf %2, %4 : vector<16x64xf32>
    %c0_5 = arith.constant 0 : index
    %c0_6 = arith.constant 0 : index
    %6 = vector.load %arg3[%c0_5, %c0_6] : memref<1x64xf32, #tpu.memory_space<vmem>>, vector<1x64xf32>
    %c0_7 = arith.constant 0 : index
    %c0_8 = arith.constant 0 : index
    %7 = vector.load %arg2[%c0_7, %c0_8] : memref<64x64xf32, #tpu.memory_space<vmem>>, vector<64x64xf32>
    %8 = tpu.iota {dimensions = array<i32: 1>} : vector<2x64xi32>
    %cst_9 = arith.constant 0.000000e+00 : f32
    %9 = vector.broadcast %cst_9 : f32 to vector<2x64xf32>
    %10 = vector.extract_strided_slice %5 {offsets = [0, 0], sizes = [2, 64], strides = [1, 1]} : vector<16x64xf32> to vector<2x64xf32>
    %cst_10 = arith.constant dense<0.000000e+00> : vector<2x64xf32>
    %11 = tpu.matmul %9, %7, %cst_10 {dimension_numbers = #tpu.dot_dimension_numbers<[1], [0], [0], [1], [0, 0, 1, 1], [], []>} : vector<2x64xf32>, vector<64x64xf32>, vector<2x64xf32> -> vector<2x64xf32>
    %12 = arith.addf %11, %10 : vector<2x64xf32>
    %13 = math.tanh %12 : vector<2x64xf32>
    %c32_i32 = arith.constant 32 : i32
    %14 = vector.broadcast %c32_i32 : i32 to vector<2x64xi32>
    %15 = arith.cmpi slt, %8, %14 : vector<2x64xi32>
    %cst_11 = arith.constant 0.000000e+00 : f32
    %16 = vector.broadcast %cst_11 : f32 to vector<2x64xf32>
    %17 = arith.select %15, %13, %16 : vector<2x64xi1>, vector<2x64xf32>
    %18 = vector.extract_strided_slice %5 {offsets = [2, 0], sizes = [2, 64], strides = [1, 1]} : vector<16x64xf32> to vector<2x64xf32>
    %cst_12 = arith.constant dense<0.000000e+00> : vector<2x64xf32>
    %19 = tpu.matmul %17, %7, %cst_12 {dimension_numbers = #tpu.dot_dimension_numbers<[1], [0], [0], [1], [0, 0, 1, 1], [], []>} : vector<2x64xf32>, vector<64x64xf32>, vector<2x64xf32> -> vector<2x64xf32>
    %20 = arith.addf %19, %18 : vector<2x64xf32>
    %21 = math.tanh %20 : vector<2x64xf32>
    %22 = vector.extract_strided_slice %5 {offsets = [4, 0], sizes = [2, 64], strides = [1, 1]} : vector<16x64xf32> to vector<2x64xf32>
    %cst_13 = arith.constant dense<0.000000e+00> : vector<2x64xf32>
    %23 = tpu.matmul %21, %7, %cst_13 {dimension_numbers = #tpu.dot_dimension_numbers<[1], [0], [0], [1], [0, 0, 1, 1], [], []>} : vector<2x64xf32>, vector<64x64xf32>, vector<2x64xf32> -> vector<2x64xf32>
    %24 = arith.addf %23, %22 : vector<2x64xf32>
    %25 = math.tanh %24 : vector<2x64xf32>
    %26 = vector.extract_strided_slice %5 {offsets = [6, 0], sizes = [2, 64], strides = [1, 1]} : vector<16x64xf32> to vector<2x64xf32>
    %cst_14 = arith.constant dense<0.000000e+00> : vector<2x64xf32>
    %27 = tpu.matmul %25, %7, %cst_14 {dimension_numbers = #tpu.dot_dimension_numbers<[1], [0], [0], [1], [0, 0, 1, 1], [], []>} : vector<2x64xf32>, vector<64x64xf32>, vector<2x64xf32> -> vector<2x64xf32>
    %28 = arith.addf %27, %26 : vector<2x64xf32>
    %29 = math.tanh %28 : vector<2x64xf32>
    %30 = vector.extract_strided_slice %5 {offsets = [8, 0], sizes = [2, 64], strides = [1, 1]} : vector<16x64xf32> to vector<2x64xf32>
    %cst_15 = arith.constant dense<0.000000e+00> : vector<2x64xf32>
    %31 = tpu.matmul %29, %7, %cst_15 {dimension_numbers = #tpu.dot_dimension_numbers<[1], [0], [0], [1], [0, 0, 1, 1], [], []>} : vector<2x64xf32>, vector<64x64xf32>, vector<2x64xf32> -> vector<2x64xf32>
    %32 = arith.addf %31, %30 : vector<2x64xf32>
    %33 = math.tanh %32 : vector<2x64xf32>
    %34 = vector.extract_strided_slice %5 {offsets = [10, 0], sizes = [2, 64], strides = [1, 1]} : vector<16x64xf32> to vector<2x64xf32>
    %cst_16 = arith.constant dense<0.000000e+00> : vector<2x64xf32>
    %35 = tpu.matmul %33, %7, %cst_16 {dimension_numbers = #tpu.dot_dimension_numbers<[1], [0], [0], [1], [0, 0, 1, 1], [], []>} : vector<2x64xf32>, vector<64x64xf32>, vector<2x64xf32> -> vector<2x64xf32>
    %36 = arith.addf %35, %34 : vector<2x64xf32>
    %37 = math.tanh %36 : vector<2x64xf32>
    %38 = vector.extract_strided_slice %5 {offsets = [12, 0], sizes = [2, 64], strides = [1, 1]} : vector<16x64xf32> to vector<2x64xf32>
    %cst_17 = arith.constant dense<0.000000e+00> : vector<2x64xf32>
    %39 = tpu.matmul %37, %7, %cst_17 {dimension_numbers = #tpu.dot_dimension_numbers<[1], [0], [0], [1], [0, 0, 1, 1], [], []>} : vector<2x64xf32>, vector<64x64xf32>, vector<2x64xf32> -> vector<2x64xf32>
    %40 = arith.addf %39, %38 : vector<2x64xf32>
    %41 = math.tanh %40 : vector<2x64xf32>
    %42 = vector.extract_strided_slice %5 {offsets = [14, 0], sizes = [2, 64], strides = [1, 1]} : vector<16x64xf32> to vector<2x64xf32>
    %cst_18 = arith.constant dense<0.000000e+00> : vector<2x64xf32>
    %43 = tpu.matmul %41, %7, %cst_18 {dimension_numbers = #tpu.dot_dimension_numbers<[1], [0], [0], [1], [0, 0, 1, 1], [], []>} : vector<2x64xf32>, vector<64x64xf32>, vector<2x64xf32> -> vector<2x64xf32>
    %44 = arith.addf %43, %42 : vector<2x64xf32>
    %45 = math.tanh %44 : vector<2x64xf32>
    %46 = vector.extract_strided_slice %45 {offsets = [0, 0], sizes = [2, 32], strides = [1, 1]} : vector<2x64xf32> to vector<2x32xf32>
    %cst_19 = arith.constant dense<0.000000e+00> : vector<2x64xf32>
    %47 = tpu.matmul %45, %7, %cst_19 {dimension_numbers = #tpu.dot_dimension_numbers<[1], [0], [0], [1], [0, 0, 1, 1], [], []>} : vector<2x64xf32>, vector<64x64xf32>, vector<2x64xf32> -> vector<2x64xf32>
    %48 = vector.broadcast %6 : vector<1x64xf32> to vector<2x64xf32>
    %49 = arith.addf %47, %48 : vector<2x64xf32>
    %50 = math.tanh %49 : vector<2x64xf32>
    %51 = vector.extract_strided_slice %50 {offsets = [0, 32], sizes = [2, 32], strides = [1, 1]} : vector<2x64xf32> to vector<2x32xf32>
    %52 = tpu.concatenate %21, %25, %29, %33, %37, %41, %45, %50 in 0 : vector<2x64xf32>, vector<2x64xf32>, vector<2x64xf32>, vector<2x64xf32>, vector<2x64xf32>, vector<2x64xf32>, vector<2x64xf32>, vector<2x64xf32> -> vector<16x64xf32>
    %c0_20 = arith.constant 0 : index
    %c0_21 = arith.constant 0 : index
    %53 = vector.load %arg4[%c0_20, %c0_21] : memref<64x30xf32, #tpu.memory_space<vmem>>, vector<64x30xf32>
    %cst_22 = arith.constant dense<0.000000e+00> : vector<16x30xf32>
    %54 = tpu.matmul %52, %53, %cst_22 {dimension_numbers = #tpu.dot_dimension_numbers<[1], [0], [0], [1], [0, 0, 1, 1], [], []>} : vector<16x64xf32>, vector<64x30xf32>, vector<16x30xf32> -> vector<16x30xf32>
    %c0_23 = arith.constant 0 : index
    %c0_24 = arith.constant 0 : index
    %55 = vector.load %arg5[%c0_23, %c0_24] : memref<1x30xf32, #tpu.memory_space<vmem>>, vector<1x30xf32>
    %56 = vector.broadcast %55 : vector<1x30xf32> to vector<16x30xf32>
    %57 = arith.addf %54, %56 : vector<16x30xf32>
    %cst_25 = arith.constant 0.000000e+00 : f32
    %58 = vector.broadcast %cst_25 : f32 to vector<16x30xf32>
    %59 = arith.cmpf ogt, %57, %58 : vector<16x30xf32>
    %cst_26 = arith.constant 1.000000e+00 : f32
    %60 = vector.broadcast %cst_26 : f32 to vector<16x30xf32>
    %61 = arith.addf %57, %60 : vector<16x30xf32>
    %cst_27 = arith.constant 0.000000e+00 : f32
    %62 = vector.broadcast %cst_27 : f32 to vector<16x30xf32>
    %63 = arith.minimumf %57, %62 : vector<16x30xf32>
    %64 = math.exp %63 : vector<16x30xf32>
    %65 = arith.select %59, %61, %64 : vector<16x30xi1>, vector<16x30xf32>
    %c0_28 = arith.constant 0 : index
    %c0_29 = arith.constant 0 : index
    %66 = vector.load %arg6[%c0_28, %c0_29] : memref<16x30xf32, #tpu.memory_space<vmem>>, vector<16x30xf32>
    tpu.vector_store %arg6[%c0_28, %c0_29], %65 {strides = array<i32>} : memref<16x30xf32, #tpu.memory_space<vmem>>, vector<16x30xf32>,
    %67 = tpu.concatenate %46, %51 in 0 : vector<2x32xf32>, vector<2x32xf32> -> vector<4x32xf32>
    %c0_30 = arith.constant 0 : index
    %c0_31 = arith.constant 0 : index
    %68 = vector.load %arg7[%c0_30, %c0_31] : memref<4x32xf32, #tpu.memory_space<vmem>>, vector<4x32xf32>
    tpu.vector_store %arg7[%c0_30, %c0_31], %67 {strides = array<i32>} : memref<4x32xf32, #tpu.memory_space<vmem>>, vector<4x32xf32>,
    return
  }
}

</mosaic_0001>

<llo_original>
// kernel: ivs_rnn_forward.1
$region0: #{ivs_rnn_forward.1}
  #allocation0 [shape = 'u32[]', space=smem, size = 0x4, offset = 0x4, fixed_abs, tag = 'smem constant byte address 0x4 - core index']
  #allocation1 [shape = 'u32[144,128]{1,0:T(1,128)}', space=vmem, size = 0x12000, scoped, tag = 'internal scratch']
  %s0 = inlined_call_operand.vmem [shape: f32[16,4], index: 0, kind: input, shape index: {}]
  %s1 = inlined_call_operand.vmem [shape: f32[4,64], index: 1, kind: input, shape index: {}]
  %s2 = inlined_call_operand.vmem [shape: f32[64,64], index: 2, kind: input, shape index: {}]
  %s3 = inlined_call_operand.vmem [shape: f32[1,64], index: 3, kind: input, shape index: {}]
  %s4 = inlined_call_operand.vmem [shape: f32[64,30], index: 4, kind: input, shape index: {}]
  %s5 = inlined_call_operand.vmem [shape: f32[1,30], index: 5, kind: input, shape index: {}]
  %s6 = inlined_call_operand.vmem [shape: f32[16,30], index: 6, kind: output, shape index: {0}]
  %s7 = inlined_call_operand.hbm [shape: f32[4,32], index: 7, kind: output, shape index: {1}]
  %8 = xla_tuple %s6, %s7
  %s9 = sld [smem:[#allocation0]]
  $region42: #{ivs_rnn_forward.1} parent=0
    _
  %s11 = ssub.s32 1, %s9
  %s12 = scalar_select 0, %s11, %s9
  $region1: #{ivs_rnn_forward.1} parent=0
    #allocation2 [shape = 'u8[2048]{0}', space=vmem, size = 0x800, scoped, tag = 'output window, operand 1, single buffered']
    #allocation3 [shape = 's32[1]{0}', space=sflag, size = 0x4, scoped, tag = 'scoped memory for ivs_rnn_forward.1']
    %13 = vsyncpa [#allocation3], 0
    // Predicated region
    $region2: #{ivs_rnn_forward.1} parent=1 // pred_check
      _
    $region3: #{ivs_rnn_forward.1} parent=1 // pred_check_branch
      %15 = sbr.rel (0) target = $region5
    $region4: #{ivs_rnn_forward.1} parent=1 // pred_region
      _
    $region5: #{ivs_rnn_forward.1} parent=1 // pred_fallthru
      _
    // Predicated region
    $region6: #{ivs_rnn_forward.1} parent=1 // pred_check
      _
    $region7: #{ivs_rnn_forward.1} parent=1 // pred_check_branch
      %17 = sbr.rel (0) target = $region9
    $region8: #{ivs_rnn_forward.1} parent=1 // pred_region
      _
    $region9: #{ivs_rnn_forward.1} parent=1 // pred_fallthru
      _
    // Predicated region
    $region10: #{ivs_rnn_forward.1} parent=1 // pred_check
      _
    $region11: #{ivs_rnn_forward.1} parent=1 // pred_check_branch
      %19 = sbr.rel (0) target = $region13
    $region12: #{ivs_rnn_forward.1} parent=1 // pred_region
      _
    $region13: #{ivs_rnn_forward.1} parent=1 // pred_fallthru
      _
    // Predicated region
    $region14: #{ivs_rnn_forward.1} parent=1 // pred_check
      _
    $region15: #{ivs_rnn_forward.1} parent=1 // pred_check_branch
      %21 = sbr.rel (0) target = $region17
    $region16: #{ivs_rnn_forward.1} parent=1 // pred_region
      _
    $region17: #{ivs_rnn_forward.1} parent=1 // pred_fallthru
      _
    // Predicated region
    $region18: #{ivs_rnn_forward.1} parent=1 // pred_check
      _
    $region19: #{ivs_rnn_forward.1} parent=1 // pred_check_branch
      %23 = sbr.rel (0) target = $region21
    $region20: #{ivs_rnn_forward.1} parent=1 // pred_region
      _
    $region21: #{ivs_rnn_forward.1} parent=1 // pred_fallthru
      _
    // Predicated region
    $region22: #{ivs_rnn_forward.1} parent=1 // pred_check
      _
    $region23: #{ivs_rnn_forward.1} parent=1 // pred_check_branch
      %25 = sbr.rel (0) target = $region25
    $region24: #{ivs_rnn_forward.1} parent=1 // pred_region
      _
    $region25: #{ivs_rnn_forward.1} parent=1 // pred_fallthru
      _
    %v26 = vld [vmem:[%s0] sm:$0xff]
    %v27 = vld [vmem:[%s0 + $0x8] sm:$0xff]
    %v28 = vld [vmem:[%s1] sm:$0xf]
    %v29 = vld [vmem:[%s3] sm:$0x1]
    %v31 = vlaneseq
    %v32 = vshrl.u32 %v31, 7
    %v33 = vsub.s32 0, %v32
    %v34 = vrot.slane %v29, %v33
    %vm36 = vcmask 31744
    %v38 = vsel %vm36, %v26, 0
    %v41 = vsel %vm36, %v27, 0
    %vm43 = vcmask 1043456
    %v45 = vsel %vm43, %v28, 0
    %47 = vmatprep.subr.mxu0 0.0
    %48 = vmatpush1.msra.mxu0 %v45
    %49 = vmatprep.subr.mxu0 0.0
    %50 = vmatpush1.msra.mxu0 0.0
    %51 = vmatprep.subr.mxu0 0.0
    %52 = vmatpush1.msra.mxu0 0.0
    %53 = vmatprep.subr.mxu0 0.0
    %54 = vmatpush1.msra.mxu0 0.0
    %55 = vmatprep.subr.mxu0 0.0
    %56 = vmatpush1.msra.mxu0 0.0
    %57 = vmatprep.subr.mxu0 0.0
    %58 = vmatpush1.msra.mxu0 0.0
    %59 = vmatprep.subr.mxu0 0.0
    %60 = vmatpush1.msra.mxu0 0.0
    %61 = vmatprep.subr.mxu0 0.0
    %62 = vmatpush1.msra.mxu0 0.0
    %63 = vmatprep.subr.mxu0 0.0
    %64 = vmatpush1.msra.mxu0 0.0
    %65 = vmatprep.subr.mxu0 0.0
    %66 = vmatpush1.msra.mxu0 0.0
    %67 = vmatprep.subr.mxu0 0.0
    %68 = vmatpush1.msra.mxu0 0.0
    %69 = vmatprep.subr.mxu0 0.0
    %70 = vmatpush1.msra.mxu0 0.0
    %71 = vmatprep.subr.mxu0 0.0
    %72 = vmatpush1.msra.mxu0 0.0
    %73 = vmatprep.subr.mxu0 0.0
    %74 = vmatpush1.msra.mxu0 0.0
    %75 = vmatprep.subr.mxu0 0.0
    %76 = vmatpush1.msra.mxu0 0.0
    %77 = vmatprep.subr.mxu0 0.0
    %78 = vmatpush1.msra.mxu0 0.0
    %79 = vmatprep.subr.mxu0 0.0
    %80 = vmatpush1.msra.mxu0 0.0
    %81 = vmatprep.subr.mxu0 0.0
    %82 = vmatpush1.msra.mxu0 0.0
    %83 = vmatprep.subr.mxu0 0.0
    %84 = vmatpush1.msra.mxu0 0.0
    %85 = vmatprep.subr.mxu0 0.0
    %86 = vmatpush1.msra.mxu0 0.0
    %87 = vmatprep.subr.mxu0 0.0
    %88 = vmatpush1.msra.mxu0 0.0
    %89 = vmatprep.subr.mxu0 0.0
    %90 = vmatpush1.msra.mxu0 0.0
    %91 = vmatprep.subr.mxu0 0.0
    %92 = vmatpush1.msra.mxu0 0.0
    %93 = vmatprep.subr.mxu0 0.0
    %94 = vmatpush1.msra.mxu0 0.0
    %95 = vmatprep.subr.mxu0 0.0
    %96 = vmatpush1.msra.mxu0 0.0
    %97 = vmatprep.subr.mxu0 0.0
    %98 = vmatpush1.msra.mxu0 0.0
    %99 = vmatprep.subr.mxu0 0.0
    %100 = vmatpush1.msra.mxu0 0.0
    %101 = vmatprep.subr.mxu0 0.0
    %102 = vmatpush1.msra.mxu0 0.0
    %103 = vmatprep.subr.mxu0 0.0
    %104 = vmatpush1.msra.mxu0 0.0
    %105 = vmatprep.subr.mxu0 0.0
    %106 = vmatpush1.msra.mxu0 0.0
    %107 = vmatprep.subr.mxu0 0.0
    %108 = vmatpush1.msra.mxu0 0.0
    %109 = vmatprep.subr.mxu0 0.0
    %110 = vmatpush1.msra.mxu0 0.0
    %111 = vmatprep.mubr.f32.mxu0 0.0
    %112 = vmatmul.mubr.f32.gmra.mrb[0].mxu0 %v38
    %v113 = vpop.f32.mrb[0].mxu0
    %v114 = vadd.f32 %v34, %v113
    %v115 = vpop.f32.mrb[0].mxu0
    %116 = vmatprep.mubr.f32.mxu0 0.0
    %117 = vmatmul.mubr.f32.gmra.mrb[0].mxu0 %v41
    %v118 = vpop.f32.mrb[0].mxu0
    %v119 = vadd.f32 %v34, %v118
    %v120 = vpop.f32.mrb[0].mxu0
    %121 = vdwg.mxu0
    %v122 = vld [vmem:[%s2] sm:$0xff]
    %v123 = vld [vmem:[%s2 + $0x8] sm:$0xff]
    %v124 = vld [vmem:[%s2 + $0x10] sm:$0xff]
    %v125 = vld [vmem:[%s2 + $0x18] sm:$0xff]
    %v126 = vld [vmem:[%s2 + $0x20] sm:$0xff]
    %v127 = vld [vmem:[%s2 + $0x28] sm:$0xff]
    %v128 = vld [vmem:[%s2 + $0x30] sm:$0xff]
    %v129 = vld [vmem:[%s2 + $0x38] sm:$0xff]
    %v130 = vlaneseq
    %v131 = vand.u32 %v130, 127
    %vm132 = vcmask 523264
    %v134 = vsel %vm132, 0.0, 0
    %136 = vmatprep.subr.mxu0 0.0
    %137 = vmatpush1.msra.mxu0 %v122
    %138 = vmatprep.subr.mxu0 0.0
    %139 = vmatpush1.msra.mxu0 %v123
    %140 = vmatprep.subr.mxu0 0.0
    %141 = vmatpush1.msra.mxu0 %v124
    %142 = vmatprep.subr.mxu0 0.0
    %143 = vmatpush1.msra.mxu0 %v125
    %144 = vmatprep.subr.mxu0 0.0
    %145 = vmatpush1.msra.mxu0 %v126
    %146 = vmatprep.subr.mxu0 0.0
    %147 = vmatpush1.msra.mxu0 %v127
    %148 = vmatprep.subr.mxu0 0.0
    %149 = vmatpush1.msra.mxu0 %v128
    %150 = vmatprep.subr.mxu0 0.0
    %151 = vmatpush1.msra.mxu0 %v129
    %152 = vmatprep.subr.mxu0 0.0
    %153 = vmatpush1.msra.mxu0 0.0
    %154 = vmatprep.subr.mxu0 0.0
    %155 = vmatpush1.msra.mxu0 0.0
    %156 = vmatprep.subr.mxu0 0.0
    %157 = vmatpush1.msra.mxu0 0.0
    %158 = vmatprep.subr.mxu0 0.0
    %159 = vmatpush1.msra.mxu0 0.0
    %160 = vmatprep.subr.mxu0 0.0
    %161 = vmatpush1.msra.mxu0 0.0
    %162 = vmatprep.subr.mxu0 0.0
    %163 = vmatpush1.msra.mxu0 0.0
    %164 = vmatprep.subr.mxu0 0.0
    %165 = vmatpush1.msra.mxu0 0.0
    %166 = vmatprep.subr.mxu0 0.0
    %167 = vmatpush1.msra.mxu0 0.0
    %168 = vmatprep.subr.mxu0 0.0
    %169 = vmatpush1.msra.mxu0 0.0
    %170 = vmatprep.subr.mxu0 0.0
    %171 = vmatpush1.msra.mxu0 0.0
    %172 = vmatprep.subr.mxu0 0.0
    %173 = vmatpush1.msra.mxu0 0.0
    %174 = vmatprep.subr.mxu0 0.0
    %175 = vmatpush1.msra.mxu0 0.0
    %176 = vmatprep.subr.mxu0 0.0
    %177 = vmatpush1.msra.mxu0 0.0
    %178 = vmatprep.subr.mxu0 0.0
    %179 = vmatpush1.msra.mxu0 0.0
    %180 = vmatprep.subr.mxu0 0.0
    %181 = vmatpush1.msra.mxu0 0.0
    %182 = vmatprep.subr.mxu0 0.0
    %183 = vmatpush1.msra.mxu0 0.0
    %184 = vmatprep.subr.mxu0 0.0
    %185 = vmatpush1.msra.mxu0 0.0
    %186 = vmatprep.subr.mxu0 0.0
    %187 = vmatpush1.msra.mxu0 0.0
    %188 = vmatprep.subr.mxu0 0.0
    %189 = vmatpush1.msra.mxu0 0.0
    %190 = vmatprep.subr.mxu0 0.0
    %191 = vmatpush1.msra.mxu0 0.0
    %192 = vmatprep.subr.mxu0 0.0
    %193 = vmatpush1.msra.mxu0 0.0
    %194 = vmatprep.subr.mxu0 0.0
    %195 = vmatpush1.msra.mxu0 0.0
    %196 = vmatprep.subr.mxu0 0.0
    %197 = vmatpush1.msra.mxu0 0.0
    %198 = vmatprep.subr.mxu0 0.0
    %199 = vmatpush1.msra.mxu0 0.0
    %200 = vmatprep.mubr.f32.mxu0 0.0
    %201 = vmatmul.mubr.f32.gmra.mrb[0].mxu0 %v134
    %v202 = vpop.f32.mrb[0].mxu0
    %v203 = vadd.f32 %v114, %v202
    %v204 = vpop.f32.mrb[0].mxu0
    %205 = vdwg.mxu0
    %v206 = vtanh.pop %v203
    %vm207 = vcmp.lt.s32.totalorder %v131, 32
    %v208 = vsel %vm207, %v206, 0.0
    %v210 = vrot.slane %v114, 2
    %v213 = vsel %vm132, %v208, 0
    %215 = vmatprep.subr.mxu0 0.0
    %216 = vmatpush1.msra.mxu0 %v122
    %217 = vmatprep.subr.mxu0 0.0
    %218 = vmatpush1.msra.mxu0 %v123
    %219 = vmatprep.subr.mxu0 0.0
    %220 = vmatpush1.msra.mxu0 %v124
    %221 = vmatprep.subr.mxu0 0.0
    %222 = vmatpush1.msra.mxu0 %v125
    %223 = vmatprep.subr.mxu0 0.0
    %224 = vmatpush1.msra.mxu0 %v126
    %225 = vmatprep.subr.mxu0 0.0
    %226 = vmatpush1.msra.mxu0 %v127
    %227 = vmatprep.subr.mxu0 0.0
    %228 = vmatpush1.msra.mxu0 %v128
    %229 = vmatprep.subr.mxu0 0.0
    %230 = vmatpush1.msra.mxu0 %v129
    %231 = vmatprep.subr.mxu0 0.0
    %232 = vmatpush1.msra.mxu0 0.0
    %233 = vmatprep.subr.mxu0 0.0
    %234 = vmatpush1.msra.mxu0 0.0
    %235 = vmatprep.subr.mxu0 0.0
    %236 = vmatpush1.msra.mxu0 0.0
    %237 = vmatprep.subr.mxu0 0.0
    %238 = vmatpush1.msra.mxu0 0.0
    %239 = vmatprep.subr.mxu0 0.0
    %240 = vmatpush1.msra.mxu0 0.0
    %241 = vmatprep.subr.mxu0 0.0
    %242 = vmatpush1.msra.mxu0 0.0
    %243 = vmatprep.subr.mxu0 0.0
    %244 = vmatpush1.msra.mxu0 0.0
    %245 = vmatprep.subr.mxu0 0.0
    %246 = vmatpush1.msra.mxu0 0.0
    %247 = vmatprep.subr.mxu0 0.0
    %248 = vmatpush1.msra.mxu0 0.0
    %249 = vmatprep.subr.mxu0 0.0
    %250 = vmatpush1.msra.mxu0 0.0
    %251 = vmatprep.subr.mxu0 0.0
    %252 = vmatpush1.msra.mxu0 0.0
    %253 = vmatprep.subr.mxu0 0.0
    %254 = vmatpush1.msra.mxu0 0.0
    %255 = vmatprep.subr.mxu0 0.0
    %256 = vmatpush1.msra.mxu0 0.0
    %257 = vmatprep.subr.mxu0 0.0
    %258 = vmatpush1.msra.mxu0 0.0
    %259 = vmatprep.subr.mxu0 0.0
    %260 = vmatpush1.msra.mxu0 0.0
    %261 = vmatprep.subr.mxu0 0.0
    %262 = vmatpush1.msra.mxu0 0.0
    %263 = vmatprep.subr.mxu0 0.0
    %264 = vmatpush1.msra.mxu0 0.0
    %265 = vmatprep.subr.mxu0 0.0
    %266 = vmatpush1.msra.mxu0 0.0
    %267 = vmatprep.subr.mxu0 0.0
    %268 = vmatpush1.msra.mxu0 0.0
    %269 = vmatprep.subr.mxu0 0.0
    %270 = vmatpush1.msra.mxu0 0.0
    %271 = vmatprep.subr.mxu0 0.0
    %272 = vmatpush1.msra.mxu0 0.0
    %273 = vmatprep.subr.mxu0 0.0
    %274 = vmatpush1.msra.mxu0 0.0
    %275 = vmatprep.subr.mxu0 0.0
    %276 = vmatpush1.msra.mxu0 0.0
    %277 = vmatprep.subr.mxu0 0.0
    %278 = vmatpush1.msra.mxu0 0.0
    %279 = vmatprep.mubr.f32.mxu0 0.0
    %280 = vmatmul.mubr.f32.gmra.mrb[0].mxu0 %v213
    %v281 = vpop.f32.mrb[0].mxu0
    %v282 = vadd.f32 %v210, %v281
    %v283 = vpop.f32.mrb[0].mxu0
    %284 = vdwg.mxu0
    %v285 = vtanh.pop %v282
    %v286 = vrot.slane %v114, 4
    %v289 = vsel %vm132, %v285, 0
    %291 = vmatprep.subr.mxu0 0.0
    %292 = vmatpush1.msra.mxu0 %v122
    %293 = vmatprep.subr.mxu0 0.0
    %294 = vmatpush1.msra.mxu0 %v123
    %295 = vmatprep.subr.mxu0 0.0
    %296 = vmatpush1.msra.mxu0 %v124
    %297 = vmatprep.subr.mxu0 0.0
    %298 = vmatpush1.msra.mxu0 %v125
    %299 = vmatprep.subr.mxu0 0.0
    %300 = vmatpush1.msra.mxu0 %v126
    %301 = vmatprep.subr.mxu0 0.0
    %302 = vmatpush1.msra.mxu0 %v127
    %303 = vmatprep.subr.mxu0 0.0
    %304 = vmatpush1.msra.mxu0 %v128
    %305 = vmatprep.subr.mxu0 0.0
    %306 = vmatpush1.msra.mxu0 %v129
    %307 = vmatprep.subr.mxu0 0.0
    %308 = vmatpush1.msra.mxu0 0.0
    %309 = vmatprep.subr.mxu0 0.0
    %310 = vmatpush1.msra.mxu0 0.0
    %311 = vmatprep.subr.mxu0 0.0
    %312 = vmatpush1.msra.mxu0 0.0
    %313 = vmatprep.subr.mxu0 0.0
    %314 = vmatpush1.msra.mxu0 0.0
    %315 = vmatprep.subr.mxu0 0.0
    %316 = vmatpush1.msra.mxu0 0.0
    %317 = vmatprep.subr.mxu0 0.0
    %318 = vmatpush1.msra.mxu0 0.0
    %319 = vmatprep.subr.mxu0 0.0
    %320 = vmatpush1.msra.mxu0 0.0
    %321 = vmatprep.subr.mxu0 0.0
    %322 = vmatpush1.msra.mxu0 0.0
    %323 = vmatprep.subr.mxu0 0.0
    %324 = vmatpush1.msra.mxu0 0.0
    %325 = vmatprep.subr.mxu0 0.0
    %326 = vmatpush1.msra.mxu0 0.0
    %327 = vmatprep.subr.mxu0 0.0
    %328 = vmatpush1.msra.mxu0 0.0
    %329 = vmatprep.subr.mxu0 0.0
    %330 = vmatpush1.msra.mxu0 0.0
    %331 = vmatprep.subr.mxu0 0.0
    %332 = vmatpush1.msra.mxu0 0.0
    %333 = vmatprep.subr.mxu0 0.0
    %334 = vmatpush1.msra.mxu0 0.0
    %335 = vmatprep.subr.mxu0 0.0
    %336 = vmatpush1.msra.mxu0 0.0
    %337 = vmatprep.subr.mxu0 0.0
    %338 = vmatpush1.msra.mxu0 0.0
    %339 = vmatprep.subr.mxu0 0.0
    %340 = vmatpush1.msra.mxu0 0.0
    %341 = vmatprep.subr.mxu0 0.0
    %342 = vmatpush1.msra.mxu0 0.0
    %343 = vmatprep.subr.mxu0 0.0
    %344 = vmatpush1.msra.mxu0 0.0
    %345 = vmatprep.subr.mxu0 0.0
    %346 = vmatpush1.msra.mxu0 0.0
    %347 = vmatprep.subr.mxu0 0.0
    %348 = vmatpush1.msra.mxu0 0.0
    %349 = vmatprep.subr.mxu0 0.0
    %350 = vmatpush1.msra.mxu0 0.0
    %351 = vmatprep.subr.mxu0 0.0
    %352 = vmatpush1.msra.mxu0 0.0
    %353 = vmatprep.subr.mxu0 0.0
    %354 = vmatpush1.msra.mxu0 0.0
    %355 = vmatprep.mubr.f32.mxu0 0.0
    %356 = vmatmul.mubr.f32.gmra.mrb[0].mxu0 %v289
    %v357 = vpop.f32.mrb[0].mxu0
    %v358 = vadd.f32 %v286, %v357
    %v359 = vpop.f32.mrb[0].mxu0
    %360 = vdwg.mxu0
    %v361 = vtanh.pop %v358
    %v362 = vrot.slane %v114, 6
    %v365 = vsel %vm132, %v361, 0
    %367 = vmatprep.subr.mxu0 0.0
    %368 = vmatpush1.msra.mxu0 %v122
    %369 = vmatprep.subr.mxu0 0.0
    %370 = vmatpush1.msra.mxu0 %v123
    %371 = vmatprep.subr.mxu0 0.0
    %372 = vmatpush1.msra.mxu0 %v124
    %373 = vmatprep.subr.mxu0 0.0
    %374 = vmatpush1.msra.mxu0 %v125
    %375 = vmatprep.subr.mxu0 0.0
    %376 = vmatpush1.msra.mxu0 %v126
    %377 = vmatprep.subr.mxu0 0.0
    %378 = vmatpush1.msra.mxu0 %v127
    %379 = vmatprep.subr.mxu0 0.0
    %380 = vmatpush1.msra.mxu0 %v128
    %381 = vmatprep.subr.mxu0 0.0
    %382 = vmatpush1.msra.mxu0 %v129
    %383 = vmatprep.subr.mxu0 0.0
    %384 = vmatpush1.msra.mxu0 0.0
    %385 = vmatprep.subr.mxu0 0.0
    %386 = vmatpush1.msra.mxu0 0.0
    %387 = vmatprep.subr.mxu0 0.0
    %388 = vmatpush1.msra.mxu0 0.0
    %389 = vmatprep.subr.mxu0 0.0
    %390 = vmatpush1.msra.mxu0 0.0
    %391 = vmatprep.subr.mxu0 0.0
    %392 = vmatpush1.msra.mxu0 0.0
    %393 = vmatprep.subr.mxu0 0.0
    %394 = vmatpush1.msra.mxu0 0.0
    %395 = vmatprep.subr.mxu0 0.0
    %396 = vmatpush1.msra.mxu0 0.0
    %397 = vmatprep.subr.mxu0 0.0
    %398 = vmatpush1.msra.mxu0 0.0
    %399 = vmatprep.subr.mxu0 0.0
    %400 = vmatpush1.msra.mxu0 0.0
    %401 = vmatprep.subr.mxu0 0.0
    %402 = vmatpush1.msra.mxu0 0.0
    %403 = vmatprep.subr.mxu0 0.0
    %404 = vmatpush1.msra.mxu0 0.0
    %405 = vmatprep.subr.mxu0 0.0
    %406 = vmatpush1.msra.mxu0 0.0
    %407 = vmatprep.subr.mxu0 0.0
    %408 = vmatpush1.msra.mxu0 0.0
    %409 = vmatprep.subr.mxu0 0.0
    %410 = vmatpush1.msra.mxu0 0.0
    %411 = vmatprep.subr.mxu0 0.0
    %412 = vmatpush1.msra.mxu0 0.0
    %413 = vmatprep.subr.mxu0 0.0
    %414 = vmatpush1.msra.mxu0 0.0
    %415 = vmatprep.subr.mxu0 0.0
    %416 = vmatpush1.msra.mxu0 0.0
    %417 = vmatprep.subr.mxu0 0.0
    %418 = vmatpush1.msra.mxu0 0.0
    %419 = vmatprep.subr.mxu0 0.0
    %420 = vmatpush1.msra.mxu0 0.0
    %421 = vmatprep.subr.mxu0 0.0
    %422 = vmatpush1.msra.mxu0 0.0
    %423 = vmatprep.subr.mxu0 0.0
    %424 = vmatpush1.msra.mxu0 0.0
    %425 = vmatprep.subr.mxu0 0.0
    %426 = vmatpush1.msra.mxu0 0.0
    %427 = vmatprep.subr.mxu0 0.0
    %428 = vmatpush1.msra.mxu0 0.0
    %429 = vmatprep.subr.mxu0 0.0
    %430 = vmatpush1.msra.mxu0 0.0
    %431 = vmatprep.mubr.f32.mxu0 0.0
    %432 = vmatmul.mubr.f32.gmra.mrb[0].mxu0 %v365
    %v433 = vpop.f32.mrb[0].mxu0
    %v434 = vadd.f32 %v362, %v433
    %v435 = vpop.f32.mrb[0].mxu0
    %436 = vdwg.mxu0
    %v437 = vtanh.pop %v434
    %v439 = vsel %vm132, %v437, 0
    %441 = vmatprep.subr.mxu0 0.0
    %442 = vmatpush1.msra.mxu0 %v122
    %443 = vmatprep.subr.mxu0 0.0
    %444 = vmatpush1.msra.mxu0 %v123
    %445 = vmatprep.subr.mxu0 0.0
    %446 = vmatpush1.msra.mxu0 %v124
    %447 = vmatprep.subr.mxu0 0.0
    %448 = vmatpush1.msra.mxu0 %v125
    %449 = vmatprep.subr.mxu0 0.0
    %450 = vmatpush1.msra.mxu0 %v126
    %451 = vmatprep.subr.mxu0 0.0
    %452 = vmatpush1.msra.mxu0 %v127
    %453 = vmatprep.subr.mxu0 0.0
    %454 = vmatpush1.msra.mxu0 %v128
    %455 = vmatprep.subr.mxu0 0.0
    %456 = vmatpush1.msra.mxu0 %v129
    %457 = vmatprep.subr.mxu0 0.0
    %458 = vmatpush1.msra.mxu0 0.0
    %459 = vmatprep.subr.mxu0 0.0
    %460 = vmatpush1.msra.mxu0 0.0
    %461 = vmatprep.subr.mxu0 0.0
    %462 = vmatpush1.msra.mxu0 0.0
    %463 = vmatprep.subr.mxu0 0.0
    %464 = vmatpush1.msra.mxu0 0.0
    %465 = vmatprep.subr.mxu0 0.0
    %466 = vmatpush1.msra.mxu0 0.0
    %467 = vmatprep.subr.mxu0 0.0
    %468 = vmatpush1.msra.mxu0 0.0
    %469 = vmatprep.subr.mxu0 0.0
    %470 = vmatpush1.msra.mxu0 0.0
    %471 = vmatprep.subr.mxu0 0.0
    %472 = vmatpush1.msra.mxu0 0.0
    %473 = vmatprep.subr.mxu0 0.0
    %474 = vmatpush1.msra.mxu0 0.0
    %475 = vmatprep.subr.mxu0 0.0
    %476 = vmatpush1.msra.mxu0 0.0
    %477 = vmatprep.subr.mxu0 0.0
    %478 = vmatpush1.msra.mxu0 0.0
    %479 = vmatprep.subr.mxu0 0.0
    %480 = vmatpush1.msra.mxu0 0.0
    %481 = vmatprep.subr.mxu0 0.0
    %482 = vmatpush1.msra.mxu0 0.0
    %483 = vmatprep.subr.mxu0 0.0
    %484 = vmatpush1.msra.mxu0 0.0
    %485 = vmatprep.subr.mxu0 0.0
    %486 = vmatpush1.msra.mxu0 0.0
    %487 = vmatprep.subr.mxu0 0.0
    %488 = vmatpush1.msra.mxu0 0.0
    %489 = vmatprep.subr.mxu0 0.0
    %490 = vmatpush1.msra.mxu0 0.0
    %491 = vmatprep.subr.mxu0 0.0
    %492 = vmatpush1.msra.mxu0 0.0
    %493 = vmatprep.subr.mxu0 0.0
    %494 = vmatpush1.msra.mxu0 0.0
    %495 = vmatprep.subr.mxu0 0.0
    %496 = vmatpush1.msra.mxu0 0.0
    %497 = vmatprep.subr.mxu0 0.0
    %498 = vmatpush1.msra.mxu0 0.0
    %499 = vmatprep.subr.mxu0 0.0
    %500 = vmatpush1.msra.mxu0 0.0
    %501 = vmatprep.subr.mxu0 0.0
    %502 = vmatpush1.msra.mxu0 0.0
    %503 = vmatprep.subr.mxu0 0.0
    %504 = vmatpush1.msra.mxu0 0.0
    %505 = vmatprep.mubr.f32.mxu0 0.0
    %506 = vmatmul.mubr.f32.gmra.mrb[0].mxu0 %v439
    %v507 = vpop.f32.mrb[0].mxu0
    %v508 = vadd.f32 %v119, %v507
    %v509 = vpop.f32.mrb[0].mxu0
    %510 = vdwg.mxu0
    %v511 = vtanh.pop %v508
    %v513 = vrot.slane %v119, 2
    %v516 = vsel %vm132, %v511, 0
    %518 = vmatprep.subr.mxu0 0.0
    %519 = vmatpush1.msra.mxu0 %v122
    %520 = vmatprep.subr.mxu0 0.0
    %521 = vmatpush1.msra.mxu0 %v123
    %522 = vmatprep.subr.mxu0 0.0
    %523 = vmatpush1.msra.mxu0 %v124
    %524 = vmatprep.subr.mxu0 0.0
    %525 = vmatpush1.msra.mxu0 %v125
    %526 = vmatprep.subr.mxu0 0.0
    %527 = vmatpush1.msra.mxu0 %v126
    %528 = vmatprep.subr.mxu0 0.0
    %529 = vmatpush1.msra.mxu0 %v127
    %530 = vmatprep.subr.mxu0 0.0
    %531 = vmatpush1.msra.mxu0 %v128
    %532 = vmatprep.subr.mxu0 0.0
    %533 = vmatpush1.msra.mxu0 %v129
    %534 = vmatprep.subr.mxu0 0.0
    %535 = vmatpush1.msra.mxu0 0.0
    %536 = vmatprep.subr.mxu0 0.0
    %537 = vmatpush1.msra.mxu0 0.0
    %538 = vmatprep.subr.mxu0 0.0
    %539 = vmatpush1.msra.mxu0 0.0
    %540 = vmatprep.subr.mxu0 0.0
    %541 = vmatpush1.msra.mxu0 0.0
    %542 = vmatprep.subr.mxu0 0.0
    %543 = vmatpush1.msra.mxu0 0.0
    %544 = vmatprep.subr.mxu0 0.0
    %545 = vmatpush1.msra.mxu0 0.0
    %546 = vmatprep.subr.mxu0 0.0
    %547 = vmatpush1.msra.mxu0 0.0
    %548 = vmatprep.subr.mxu0 0.0
    %549 = vmatpush1.msra.mxu0 0.0
    %550 = vmatprep.subr.mxu0 0.0
    %551 = vmatpush1.msra.mxu0 0.0
    %552 = vmatprep.subr.mxu0 0.0
    %553 = vmatpush1.msra.mxu0 0.0
    %554 = vmatprep.subr.mxu0 0.0
    %555 = vmatpush1.msra.mxu0 0.0
    %556 = vmatprep.subr.mxu0 0.0
    %557 = vmatpush1.msra.mxu0 0.0
    %558 = vmatprep.subr.mxu0 0.0
    %559 = vmatpush1.msra.mxu0 0.0
    %560 = vmatprep.subr.mxu0 0.0
    %561 = vmatpush1.msra.mxu0 0.0
    %562 = vmatprep.subr.mxu0 0.0
    %563 = vmatpush1.msra.mxu0 0.0
    %564 = vmatprep.subr.mxu0 0.0
    %565 = vmatpush1.msra.mxu0 0.0
    %566 = vmatprep.subr.mxu0 0.0
    %567 = vmatpush1.msra.mxu0 0.0
    %568 = vmatprep.subr.mxu0 0.0
    %569 = vmatpush1.msra.mxu0 0.0
    %570 = vmatprep.subr.mxu0 0.0
    %571 = vmatpush1.msra.mxu0 0.0
    %572 = vmatprep.subr.mxu0 0.0
    %573 = vmatpush1.msra.mxu0 0.0
    %574 = vmatprep.subr.mxu0 0.0
    %575 = vmatpush1.msra.mxu0 0.0
    %576 = vmatprep.subr.mxu0 0.0
    %577 = vmatpush1.msra.mxu0 0.0
    %578 = vmatprep.subr.mxu0 0.0
    %579 = vmatpush1.msra.mxu0 0.0
    %580 = vmatprep.subr.mxu0 0.0
    %581 = vmatpush1.msra.mxu0 0.0
    %582 = vmatprep.mubr.f32.mxu0 0.0
    %583 = vmatmul.mubr.f32.gmra.mrb[0].mxu0 %v516
    %v584 = vpop.f32.mrb[0].mxu0
    %v585 = vadd.f32 %v513, %v584
    %v586 = vpop.f32.mrb[0].mxu0
    %587 = vdwg.mxu0
    %v588 = vtanh.pop %v585
    %v589 = vrot.slane %v119, 4
    %v592 = vsel %vm132, %v588, 0
    %594 = vmatprep.subr.mxu0 0.0
    %595 = vmatpush1.msra.mxu0 %v122
    %596 = vmatprep.subr.mxu0 0.0
    %597 = vmatpush1.msra.mxu0 %v123
    %598 = vmatprep.subr.mxu0 0.0
    %599 = vmatpush1.msra.mxu0 %v124
    %600 = vmatprep.subr.mxu0 0.0
    %601 = vmatpush1.msra.mxu0 %v125
    %602 = vmatprep.subr.mxu0 0.0
    %603 = vmatpush1.msra.mxu0 %v126
    %604 = vmatprep.subr.mxu0 0.0
    %605 = vmatpush1.msra.mxu0 %v127
    %606 = vmatprep.subr.mxu0 0.0
    %607 = vmatpush1.msra.mxu0 %v128
    %608 = vmatprep.subr.mxu0 0.0
    %609 = vmatpush1.msra.mxu0 %v129
    %610 = vmatprep.subr.mxu0 0.0
    %611 = vmatpush1.msra.mxu0 0.0
    %612 = vmatprep.subr.mxu0 0.0
    %613 = vmatpush1.msra.mxu0 0.0
    %614 = vmatprep.subr.mxu0 0.0
    %615 = vmatpush1.msra.mxu0 0.0
    %616 = vmatprep.subr.mxu0 0.0
    %617 = vmatpush1.msra.mxu0 0.0
    %618 = vmatprep.subr.mxu0 0.0
    %619 = vmatpush1.msra.mxu0 0.0
    %620 = vmatprep.subr.mxu0 0.0
    %621 = vmatpush1.msra.mxu0 0.0
    %622 = vmatprep.subr.mxu0 0.0
    %623 = vmatpush1.msra.mxu0 0.0
    %624 = vmatprep.subr.mxu0 0.0
    %625 = vmatpush1.msra.mxu0 0.0
    %626 = vmatprep.subr.mxu0 0.0
    %627 = vmatpush1.msra.mxu0 0.0
    %628 = vmatprep.subr.mxu0 0.0
    %629 = vmatpush1.msra.mxu0 0.0
    %630 = vmatprep.subr.mxu0 0.0
    %631 = vmatpush1.msra.mxu0 0.0
    %632 = vmatprep.subr.mxu0 0.0
    %633 = vmatpush1.msra.mxu0 0.0
    %634 = vmatprep.subr.mxu0 0.0
    %635 = vmatpush1.msra.mxu0 0.0
    %636 = vmatprep.subr.mxu0 0.0
    %637 = vmatpush1.msra.mxu0 0.0
    %638 = vmatprep.subr.mxu0 0.0
    %639 = vmatpush1.msra.mxu0 0.0
    %640 = vmatprep.subr.mxu0 0.0
    %641 = vmatpush1.msra.mxu0 0.0
    %642 = vmatprep.subr.mxu0 0.0
    %643 = vmatpush1.msra.mxu0 0.0
    %644 = vmatprep.subr.mxu0 0.0
    %645 = vmatpush1.msra.mxu0 0.0
    %646 = vmatprep.subr.mxu0 0.0
    %647 = vmatpush1.msra.mxu0 0.0
    %648 = vmatprep.subr.mxu0 0.0
    %649 = vmatpush1.msra.mxu0 0.0
    %650 = vmatprep.subr.mxu0 0.0
    %651 = vmatpush1.msra.mxu0 0.0
    %652 = vmatprep.subr.mxu0 0.0
    %653 = vmatpush1.msra.mxu0 0.0
    %654 = vmatprep.subr.mxu0 0.0
    %655 = vmatpush1.msra.mxu0 0.0
    %656 = vmatprep.subr.mxu0 0.0
    %657 = vmatpush1.msra.mxu0 0.0
    %658 = vmatprep.mubr.f32.mxu0 0.0
    %659 = vmatmul.mubr.f32.gmra.mrb[0].mxu0 %v592
    %v660 = vpop.f32.mrb[0].mxu0
    %v661 = vadd.f32 %v589, %v660
    %v662 = vpop.f32.mrb[0].mxu0
    %663 = vdwg.mxu0
    %v664 = vtanh.pop %v661
    %v665 = vrot.slane %v119, 6
    %v668 = vsel %vm132, %v664, 0
    %670 = vmatprep.subr.mxu0 0.0
    %671 = vmatpush1.msra.mxu0 %v122
    %672 = vmatprep.subr.mxu0 0.0
    %673 = vmatpush1.msra.mxu0 %v123
    %674 = vmatprep.subr.mxu0 0.0
    %675 = vmatpush1.msra.mxu0 %v124
    %676 = vmatprep.subr.mxu0 0.0
    %677 = vmatpush1.msra.mxu0 %v125
    %678 = vmatprep.subr.mxu0 0.0
    %679 = vmatpush1.msra.mxu0 %v126
    %680 = vmatprep.subr.mxu0 0.0
    %681 = vmatpush1.msra.mxu0 %v127
    %682 = vmatprep.subr.mxu0 0.0
    %683 = vmatpush1.msra.mxu0 %v128
    %684 = vmatprep.subr.mxu0 0.0
    %685 = vmatpush1.msra.mxu0 %v129
    %686 = vmatprep.subr.mxu0 0.0
    %687 = vmatpush1.msra.mxu0 0.0
    %688 = vmatprep.subr.mxu0 0.0
    %689 = vmatpush1.msra.mxu0 0.0
    %690 = vmatprep.subr.mxu0 0.0
    %691 = vmatpush1.msra.mxu0 0.0
    %692 = vmatprep.subr.mxu0 0.0
    %693 = vmatpush1.msra.mxu0 0.0
    %694 = vmatprep.subr.mxu0 0.0
    %695 = vmatpush1.msra.mxu0 0.0
    %696 = vmatprep.subr.mxu0 0.0
    %697 = vmatpush1.msra.mxu0 0.0
    %698 = vmatprep.subr.mxu0 0.0
    %699 = vmatpush1.msra.mxu0 0.0
    %700 = vmatprep.subr.mxu0 0.0
    %701 = vmatpush1.msra.mxu0 0.0
    %702 = vmatprep.subr.mxu0 0.0
    %703 = vmatpush1.msra.mxu0 0.0
    %704 = vmatprep.subr.mxu0 0.0
    %705 = vmatpush1.msra.mxu0 0.0
    %706 = vmatprep.subr.mxu0 0.0
    %707 = vmatpush1.msra.mxu0 0.0
    %708 = vmatprep.subr.mxu0 0.0
    %709 = vmatpush1.msra.mxu0 0.0
    %710 = vmatprep.subr.mxu0 0.0
    %711 = vmatpush1.msra.mxu0 0.0
    %712 = vmatprep.subr.mxu0 0.0
    %713 = vmatpush1.msra.mxu0 0.0
    %714 = vmatprep.subr.mxu0 0.0
    %715 = vmatpush1.msra.mxu0 0.0
    %716 = vmatprep.subr.mxu0 0.0
    %717 = vmatpush1.msra.mxu0 0.0
    %718 = vmatprep.subr.mxu0 0.0
    %719 = vmatpush1.msra.mxu0 0.0
    %720 = vmatprep.subr.mxu0 0.0
    %721 = vmatpush1.msra.mxu0 0.0
    %722 = vmatprep.subr.mxu0 0.0
    %723 = vmatpush1.msra.mxu0 0.0
    %724 = vmatprep.subr.mxu0 0.0
    %725 = vmatpush1.msra.mxu0 0.0
    %726 = vmatprep.subr.mxu0 0.0
    %727 = vmatpush1.msra.mxu0 0.0
    %728 = vmatprep.subr.mxu0 0.0
    %729 = vmatpush1.msra.mxu0 0.0
    %730 = vmatprep.subr.mxu0 0.0
    %731 = vmatpush1.msra.mxu0 0.0
    %732 = vmatprep.subr.mxu0 0.0
    %733 = vmatpush1.msra.mxu0 0.0
    %734 = vmatprep.mubr.f32.mxu0 0.0
    %735 = vmatmul.mubr.f32.gmra.mrb[0].mxu0 %v668
    %v736 = vpop.f32.mrb[0].mxu0
    %v737 = vadd.f32 %v665, %v736
    %v738 = vpop.f32.mrb[0].mxu0
    %739 = vdwg.mxu0
    %v740 = vtanh.pop %v737
    %v742 = vsel %vm132, %v740, 0
    %744 = vmatprep.subr.mxu0 0.0
    %745 = vmatpush1.msra.mxu0 %v122
    %746 = vmatprep.subr.mxu0 0.0
    %747 = vmatpush1.msra.mxu0 %v123
    %748 = vmatprep.subr.mxu0 0.0
    %749 = vmatpush1.msra.mxu0 %v124
    %750 = vmatprep.subr.mxu0 0.0
    %751 = vmatpush1.msra.mxu0 %v125
    %752 = vmatprep.subr.mxu0 0.0
    %753 = vmatpush1.msra.mxu0 %v126
    %754 = vmatprep.subr.mxu0 0.0
    %755 = vmatpush1.msra.mxu0 %v127
    %756 = vmatprep.subr.mxu0 0.0
    %757 = vmatpush1.msra.mxu0 %v128
    %758 = vmatprep.subr.mxu0 0.0
    %759 = vmatpush1.msra.mxu0 %v129
    %760 = vmatprep.subr.mxu0 0.0
    %761 = vmatpush1.msra.mxu0 0.0
    %762 = vmatprep.subr.mxu0 0.0
    %763 = vmatpush1.msra.mxu0 0.0
    %764 = vmatprep.subr.mxu0 0.0
    %765 = vmatpush1.msra.mxu0 0.0
    %766 = vmatprep.subr.mxu0 0.0
    %767 = vmatpush1.msra.mxu0 0.0
    %768 = vmatprep.subr.mxu0 0.0
    %769 = vmatpush1.msra.mxu0 0.0
    %770 = vmatprep.subr.mxu0 0.0
    %771 = vmatpush1.msra.mxu0 0.0
    %772 = vmatprep.subr.mxu0 0.0
    %773 = vmatpush1.msra.mxu0 0.0
    %774 = vmatprep.subr.mxu0 0.0
    %775 = vmatpush1.msra.mxu0 0.0
    %776 = vmatprep.subr.mxu0 0.0
    %777 = vmatpush1.msra.mxu0 0.0
    %778 = vmatprep.subr.mxu0 0.0
    %779 = vmatpush1.msra.mxu0 0.0
    %780 = vmatprep.subr.mxu0 0.0
    %781 = vmatpush1.msra.mxu0 0.0
    %782 = vmatprep.subr.mxu0 0.0
    %783 = vmatpush1.msra.mxu0 0.0
    %784 = vmatprep.subr.mxu0 0.0
    %785 = vmatpush1.msra.mxu0 0.0
    %786 = vmatprep.subr.mxu0 0.0
    %787 = vmatpush1.msra.mxu0 0.0
    %788 = vmatprep.subr.mxu0 0.0
    %789 = vmatpush1.msra.mxu0 0.0
    %790 = vmatprep.subr.mxu0 0.0
    %791 = vmatpush1.msra.mxu0 0.0
    %792 = vmatprep.subr.mxu0 0.0
    %793 = vmatpush1.msra.mxu0 0.0
    %794 = vmatprep.subr.mxu0 0.0
    %795 = vmatpush1.msra.mxu0 0.0
    %796 = vmatprep.subr.mxu0 0.0
    %797 = vmatpush1.msra.mxu0 0.0
    %798 = vmatprep.subr.mxu0 0.0
    %799 = vmatpush1.msra.mxu0 0.0
    %800 = vmatprep.subr.mxu0 0.0
    %801 = vmatpush1.msra.mxu0 0.0
    %802 = vmatprep.subr.mxu0 0.0
    %803 = vmatpush1.msra.mxu0 0.0
    %804 = vmatprep.subr.mxu0 0.0
    %805 = vmatpush1.msra.mxu0 0.0
    %806 = vmatprep.subr.mxu0 0.0
    %807 = vmatpush1.msra.mxu0 0.0
    %808 = vmatprep.mubr.f32.mxu0 0.0
    %809 = vmatmul.mubr.f32.gmra.mrb[0].mxu0 %v742
    %v810 = vpop.f32.mrb[0].mxu0
    %v811 = vadd.f32 %v34, %v810
    %v812 = vpop.f32.mrb[0].mxu0
    %813 = vdwg.mxu0
    %v814 = vtanh.pop %v811
    %v815 = vrot.slane %v361, 6
    %v817 = vrot.slane %v437, 4
    %v819 = vrot.slane %v511, 2
    %v821 = vrot.slane %v664, 6
    %v823 = vrot.slane %v740, 4
    %v826 = vrot.slane %v814, 2
    %vm828 = vcmask 1041408
    %v829 = vsel %vm828, %v285, %v815
    %v830 = vsel %vm43, %v829, %v817
    %vm831 = vcmask 1045504
    %v832 = vsel %vm831, %v830, %v819
    %v833 = vsel %vm828, %v588, %v821
    %v834 = vsel %vm43, %v833, %v823
    %v835 = vsel %vm831, %v834, %v826
    %v836 = vld [vmem:[%s4] sm:$0xff]
    %v837 = vld [vmem:[%s4 + $0x8] sm:$0xff]
    %v838 = vld [vmem:[%s4 + $0x10] sm:$0xff]
    %v839 = vld [vmem:[%s4 + $0x18] sm:$0xff]
    %v840 = vld [vmem:[%s4 + $0x20] sm:$0xff]
    %v841 = vld [vmem:[%s4 + $0x28] sm:$0xff]
    %v842 = vld [vmem:[%s4 + $0x30] sm:$0xff]
    %v843 = vld [vmem:[%s4 + $0x38] sm:$0xff]
    %v844 = vld [vmem:[%s5] sm:$0x1]
    %v846 = vlaneseq
    %v847 = vshrl.u32 %v846, 7
    %v848 = vsub.s32 0, %v847
    %v849 = vrot.slane %v844, %v848
    %v852 = vsel %vm132, %v832, 0
    %v855 = vsel %vm132, %v835, 0
    %857 = vmatprep.subr.mxu0 0.0
    %858 = vmatpush1.msra.mxu0 %v836
    %859 = vmatprep.subr.mxu0 0.0
    %860 = vmatpush1.msra.mxu0 %v837
    %861 = vmatprep.subr.mxu0 0.0
    %862 = vmatpush1.msra.mxu0 %v838
    %863 = vmatprep.subr.mxu0 0.0
    %864 = vmatpush1.msra.mxu0 %v839
    %865 = vmatprep.subr.mxu0 0.0
    %866 = vmatpush1.msra.mxu0 %v840
    %867 = vmatprep.subr.mxu0 0.0
    %868 = vmatpush1.msra.mxu0 %v841
    %869 = vmatprep.subr.mxu0 0.0
    %870 = vmatpush1.msra.mxu0 %v842
    %871 = vmatprep.subr.mxu0 0.0
    %872 = vmatpush1.msra.mxu0 %v843
    %873 = vmatprep.subr.mxu0 0.0
    %874 = vmatpush1.msra.mxu0 0.0
    %875 = vmatprep.subr.mxu0 0.0
    %876 = vmatpush1.msra.mxu0 0.0
    %877 = vmatprep.subr.mxu0 0.0
    %878 = vmatpush1.msra.mxu0 0.0
    %879 = vmatprep.subr.mxu0 0.0
    %880 = vmatpush1.msra.mxu0 0.0
    %881 = vmatprep.subr.mxu0 0.0
    %882 = vmatpush1.msra.mxu0 0.0
    %883 = vmatprep.subr.mxu0 0.0
    %884 = vmatpush1.msra.mxu0 0.0
    %885 = vmatprep.subr.mxu0 0.0
    %886 = vmatpush1.msra.mxu0 0.0
    %887 = vmatprep.subr.mxu0 0.0
    %888 = vmatpush1.msra.mxu0 0.0
    %889 = vmatprep.subr.mxu0 0.0
    %890 = vmatpush1.msra.mxu0 0.0
    %891 = vmatprep.subr.mxu0 0.0
    %892 = vmatpush1.msra.mxu0 0.0
    %893 = vmatprep.subr.mxu0 0.0
    %894 = vmatpush1.msra.mxu0 0.0
    %895 = vmatprep.subr.mxu0 0.0
    %896 = vmatpush1.msra.mxu0 0.0
    %897 = vmatprep.subr.mxu0 0.0
    %898 = vmatpush1.msra.mxu0 0.0
    %899 = vmatprep.subr.mxu0 0.0
    %900 = vmatpush1.msra.mxu0 0.0
    %901 = vmatprep.subr.mxu0 0.0
    %902 = vmatpush1.msra.mxu0 0.0
    %903 = vmatprep.subr.mxu0 0.0
    %904 = vmatpush1.msra.mxu0 0.0
    %905 = vmatprep.subr.mxu0 0.0
    %906 = vmatpush1.msra.mxu0 0.0
    %907 = vmatprep.subr.mxu0 0.0
    %908 = vmatpush1.msra.mxu0 0.0
    %909 = vmatprep.subr.mxu0 0.0
    %910 = vmatpush1.msra.mxu0 0.0
    %911 = vmatprep.subr.mxu0 0.0
    %912 = vmatpush1.msra.mxu0 0.0
    %913 = vmatprep.subr.mxu0 0.0
    %914 = vmatpush1.msra.mxu0 0.0
    %915 = vmatprep.subr.mxu0 0.0
    %916 = vmatpush1.msra.mxu0 0.0
    %917 = vmatprep.subr.mxu0 0.0
    %918 = vmatpush1.msra.mxu0 0.0
    %919 = vmatprep.subr.mxu0 0.0
    %920 = vmatpush1.msra.mxu0 0.0
    %921 = vmatprep.mubr.f32.mxu0 0.0
    %922 = vmatmul.mubr.f32.gmra.mrb[0].mxu0 %v852
    %v923 = vpop.f32.mrb[0].mxu0
    %v924 = vadd.f32 %v849, %v923
    %v925 = vpop.f32.mrb[0].mxu0
    %926 = vmatprep.mubr.f32.mxu0 0.0
    %927 = vmatmul.mubr.f32.gmra.mrb[0].mxu0 %v855
    %v928 = vpop.f32.mrb[0].mxu0
    %v929 = vadd.f32 %v849, %v928
    %v930 = vpop.f32.mrb[0].mxu0
    %931 = vdwg.mxu0
    %vm932 = vcmp.gt.f32.partialorder %v924, 0.0
    %vm933 = vcmp.gt.f32.partialorder %v929, 0.0
    %v934 = vadd.f32 %v924, 1.0
    %v935 = vadd.f32 %v929, 1.0
    %v936 = vmin.f32 %v924, 0.0
    %v937 = vmin.f32 %v929, 0.0
    %v938 = vmul.f32 %v936, 1.442695
    %v939 = vpow.pop %v938
    %v940 = vmul.f32 %v937, 1.442695
    %v941 = vpow.pop %v940
    %v942 = vsel %vm932, %v934, %v939
    %v943 = vsel %vm933, %v935, %v941
    %vm944 = vcmask 244736
    %945 = vst.msk [vmem:[%s6] sm:$0xff] %vm944, %v942
    %946 = vst.msk [vmem:[%s6 + $0x8] sm:$0xff] %vm944, %v943
    %v947 = vrot.slane %v814, 6
    %948 = vrot.lane.b32.xlu0 %v947, 96
    %v949 = vpop.permute.xlu0 %948
    %v951 = vsel %vm828, %v740, %v949
    %vm952 = vcmask 257024
    %953 = vst.msk [vmem:[#allocation2] sm:$0xf] %vm952, %v951
    // Predicated region
    $region26: #{ivs_rnn_forward.1} parent=1 // pred_check
      _
    $region27: #{ivs_rnn_forward.1} parent=1 // pred_check_branch
      %955 = sbr.rel (0) target = $region29
    $region28: #{ivs_rnn_forward.1} parent=1 // pred_region
      _
    $region29: #{ivs_rnn_forward.1} parent=1 // pred_fallthru
      _
    // Predicated region
    $region30: #{ivs_rnn_forward.1} parent=1 // pred_check
      _
    $region31: #{ivs_rnn_forward.1} parent=1 // pred_check_branch
      %957 = sbr.rel (0) target = $region33
    $region32: #{ivs_rnn_forward.1} parent=1 // pred_region
      %s959 = ssub.s32 64, 64
      %960 = vsyncadd [#allocation3], %s959
      %s962 = sshll.u32 [#allocation2], 4
      %s963 = int_to_ptr.vmem [resolvable:$true] %s962
      %965 = dma.vmem_to_hbm [thread:$0]  %s963, 64, %s7, [#allocation3]
    $region33: #{ivs_rnn_forward.1} parent=1 // pred_fallthru
      _
    // Predicated region
    $region34: #{ivs_rnn_forward.1} parent=1 // pred_check
      _
    $region35: #{ivs_rnn_forward.1} parent=1 // pred_check_branch
      %967 = sbr.rel (0) target = $region37
    $region36: #{ivs_rnn_forward.1} parent=1 // pred_region
      _
    $region37: #{ivs_rnn_forward.1} parent=1 // pred_fallthru
      _
    // Predicated region
    $region38: #{ivs_rnn_forward.1} parent=1 // pred_check
      _
    $region39: #{ivs_rnn_forward.1} parent=1 // pred_check_branch
      %969 = sbr.rel (0) target = $region41
    $region40: #{ivs_rnn_forward.1} parent=1 // pred_region
      %970 = dma.done [#allocation3], 64
    $region41: #{ivs_rnn_forward.1} parent=1 // pred_fallthru
      _
    %971 = vsyncpa [#allocation3], 1

</llo_original>
